<compile_context>
chip_gen: v7x
topology: tpu7x:2x2x1
jax: 0.10.0
libtpu: 0.0.40
codegen_flags: <defaults>
</compile_context>

<pallas_src>
import functools

import jax
import jax.numpy as jnp
from jax.experimental import pallas as pl
from jax.experimental.pallas import tpu as pltpu

FPAD = 128  # lane-dense feature padding (multiple of 128)


# ----------------------------------------------------------------------------
# Per-layer SAGEConv(mean) kernel: streamed mask aggregation + fused
# self/neighbor projection + bias (+ ReLU), one destination row-tile per step.
# ----------------------------------------------------------------------------
def _sage_layer_kernel(a_ref, rdeg_ref, hall_ref, hself_ref,
                       ws_ref, wn_ref, b_ref, o_ref, *, apply_relu):
    # Mean aggregation: int8 0/1 mask tile -> bf16, matmul against the full
    # (VMEM-resident) feature table, then scale the f32 accumulator by the
    # f32 reciprocal in-degree (exact 8-bit mask, no bf16-quantized 1/deg).
    a = a_ref[...].astype(jnp.bfloat16)                               # [TM, Npad]
    neigh = jnp.dot(a, hall_ref[...], preferred_element_type=jnp.float32)
    h_neigh = (neigh * rdeg_ref[...]).astype(jnp.bfloat16)            # [TM, FPAD]

    # Self + neighbor projection: two MXU matmuls into one f32 accumulator
    # (no lane concatenate).
    acc = jnp.dot(hself_ref[...], ws_ref[...], preferred_element_type=jnp.float32)
    acc = acc + jnp.dot(h_neigh, wn_ref[...], preferred_element_type=jnp.float32)
    acc = acc + b_ref[...]
    if apply_relu:
        acc = jnp.maximum(acc, 0.0)
    o_ref[...] = acc.astype(o_ref.dtype)  # cast folded into the store


# ----------------------------------------------------------------------------
# Generation-aware tiling / VMEM budget.
# ----------------------------------------------------------------------------
def _round_up(x, m):
    return ((x + m - 1) // m) * m


def _vmem_capacity_bytes():
    try:
        return int(getattr(pltpu.get_tpu_info(), "vmem_capacity_bytes"))
    except Exception:
        return 64 * 1024 * 1024  # conservative (v7x-sized) fallback


def _choose_tiling(n):
    """Pick (row_tile, padded_N, vmem_limit) for this TPU generation."""
    cap = _vmem_capacity_bytes()
    budget = int(0.75 * cap)                  # leave headroom vs physical VMEM
    tm = 512 if cap > (64 << 20) else 256     # v5e/v6e vs v7x starting row tile
    n128 = _round_up(max(n, 1), 128)

    def plan(tm_):
        n_pad = n128 if n128 <= tm_ else _round_up(n128, tm_)
        tm_eff = min(tm_, n_pad)
        est = (2 * tm_eff * n_pad              # A int8 row tiles, double-buffered
               + 2 * n_pad * FPAD * 2          # resident full h (bf16)
               + 2 * tm_eff * FPAD * 2         # h self-row tile (bf16)
               + 2 * tm_eff * FPAD * 4         # output tile (f32 worst case)
               + 2 * tm_eff * 4                # rdeg tile
               + 2 * 2 * FPAD * FPAD * 2)      # W_self / W_neigh (bf16)
        return tm_eff, n_pad, est

    tm_eff, n_pad, est = plan(tm)
    while est > budget and tm > 128:
        tm //= 2
        tm_eff, n_pad, est = plan(tm)
    return tm_eff, n_pad, budget


# ----------------------------------------------------------------------------
# One SAGEConv(mean) layer as a row-tiled pallas_call.
# ----------------------------------------------------------------------------
def _sage_layer(a_mask, rdeg, h, w_self, w_neigh, bias, *,
                tm, apply_relu, out_dtype, vmem_limit):
    n_pad, f = h.shape
    kernel = functools.partial(_sage_layer_kernel, apply_relu=apply_relu)
    return pl.pallas_call(
        kernel,
        out_shape=jax.ShapeDtypeStruct((n_pad, f), out_dtype),
        grid=(n_pad // tm,),
        in_specs=[
            pl.BlockSpec((tm, n_pad), lambda i: (i, 0)),   # streamed A mask tile (int8)
            pl.BlockSpec((tm, 1), lambda i: (i, 0)),       # 1/deg column tile (f32)
            pl.BlockSpec((n_pad, f), lambda i: (0, 0)),    # full h, resident (bf16)
            pl.BlockSpec((tm, f), lambda i: (i, 0)),       # h rows for self term (bf16)
            pl.BlockSpec((f, f), lambda i: (0, 0)),        # W_self (bf16)
            pl.BlockSpec((f, f), lambda i: (0, 0)),        # W_neigh (bf16)
            pl.BlockSpec((1, f), lambda i: (0, 0)),        # bias (f32)
        ],
        out_specs=pl.BlockSpec((tm, f), lambda i: (i, 0)),
        compiler_params=pltpu.CompilerParams(
            dimension_semantics=("parallel",),
            vmem_limit_bytes=vmem_limit,
        ),
    )(a_mask, rdeg, h, h, w_self, w_neigh, bias)


def _pad2(w, rows, cols):
    return jnp.pad(w, ((0, rows - w.shape[0]), (0, cols - w.shape[1])))


def graphsage_forward(adjs, x, params, num_classes):
    """GraphSAGE forward: 3 SAGEConv(mean) layers, one row-tiled Pallas kernel each.

    adjs:   list of 3 dense [N, N] 0/1 adjacency matrices (with self-loops)
    x:      [N, in_feats] node features (f32)
    params: list of 3 dicts {w_self, w_neigh, bias}
    """
    n = x.shape[0]
    tm, n_pad, vmem_limit = _choose_tiling(n)

    # Host-side packing (once): int8 0/1 masks + f32 reciprocal degrees,
    # zero-padded lane-dense features / weights, bf16 matmul operands.
    a_masks, rdegs = [], []
    for a in adjs:
        mask = (a > 0).astype(jnp.int8)
        deg = jnp.sum(a > 0, axis=1, keepdims=True).astype(jnp.float32)
        rdeg = 1.0 / jnp.maximum(deg, 1.0)
        a_masks.append(jnp.pad(mask, ((0, n_pad - n), (0, n_pad - n))))
        rdegs.append(jnp.pad(rdeg, ((0, n_pad - n), (0, 0))))

    h = jnp.pad(x, ((0, n_pad - n), (0, FPAD - x.shape[1]))).astype(jnp.bfloat16)

    ws, wn, bs = [], [], []
    for p in params:
        ws.append(_pad2(p["w_self"], FPAD, FPAD).astype(jnp.bfloat16))
        wn.append(_pad2(p["w_neigh"], FPAD, FPAD).astype(jnp.bfloat16))
        bs.append(_pad2(p["bias"], 1, FPAD))  # bias stays f32, padded cols = 0

    n_layers = len(params)
    for l in range(n_layers):
        last = l == n_layers - 1
        h = _sage_layer(
            a_masks[l], rdegs[l], h, ws[l], wn[l], bs[l],
            tm=tm,
            apply_relu=not last,
            out_dtype=jnp.float32 if last else jnp.bfloat16,
            vmem_limit=vmem_limit,
        )
    return h[:n, :num_classes]


# ----------------------------------------------------------------------------
# Deterministic parameter / graph construction.
# ----------------------------------------------------------------------------
def init_params(key, in_feats, h_feats, num_classes):
    dims = [(in_feats, h_feats), (h_feats, h_feats), (h_feats, num_classes)]
    params = []
    for fi, fo in dims:
        k1, k2, k3, key = jax.random.split(key, 4)
        scale = (2.0 / (fi + fo)) ** 0.5
        params.append({
            "w_self": scale * jax.random.normal(k1, (fi, fo), jnp.float32),
            "w_neigh": scale * jax.random.normal(k2, (fi, fo), jnp.float32),
            "bias": 0.1 * jax.random.normal(k3, (1, fo), jnp.float32),
        })
    return params, key


def make_adjacency(key, n, p_edge=0.15):
    """Random directed graph -> dense 0/1 adjacency with self-loops."""
    adj = (jax.random.uniform(key, (n, n)) < p_edge).astype(jnp.float32)
    return jnp.maximum(adj, jnp.eye(n, dtype=jnp.float32))


# ----------------------------------------------------------------------------
# Pure-JAX reference with the same bf16-operand / f32-accumulation math
# (independent structure: un-padded, un-tiled).
# ----------------------------------------------------------------------------
def graphsage_ref(adjs, x, params):
    cast = lambda t: t.astype(jnp.bfloat16)
    h = cast(x)
    n_layers = len(params)
    out = None
    for l, (a, p) in enumerate(zip(adjs, params)):
        rdeg = 1.0 / jnp.maximum(jnp.sum(a, axis=1, keepdims=True), 1.0)
        neigh = jnp.dot(cast(a), h, preferred_element_type=jnp.float32) * rdeg
        h_neigh = cast(neigh)
        out = (jnp.dot(h, cast(p["w_self"]), preferred_element_type=jnp.float32)
               + jnp.dot(h_neigh, cast(p["w_neigh"]), preferred_element_type=jnp.float32)
               + p["bias"])
        if l != n_layers - 1:
            out = jnp.maximum(out, 0.0)
            h = cast(out)
    return out


if __name__ == "__main__":
    key = jax.random.PRNGKey(0)

    N = 64
    IN_FEATS = 16
    H_FEATS = 32
    NUM_CLASSES = 8

    params, key = init_params(key, IN_FEATS, H_FEATS, NUM_CLASSES)

    kx, ka0, ka1, ka2 = jax.random.split(key, 4)
    x = jax.random.normal(kx, (N, IN_FEATS), jnp.float32)
    adjs = [make_adjacency(ka0, N), make_adjacency(ka1, N), make_adjacency(ka2, N)]

    out = graphsage_forward(adjs, x, params, NUM_CLASSES)
    out = jax.block_until_ready(out)

    ref = graphsage_ref(adjs, x, params)
    assert out.shape == (N, NUM_CLASSES)
    assert jnp.allclose(out, ref, atol=1e-2, rtol=1e-2), "mismatch vs JAX reference"

    print("KERNEL_OK")
</pallas_src>

<mosaic_0001>
module attributes {stable_mosaic.version = 11 : i64} {
  func.func @_sage_layer_kernel(%arg0: i32, %arg1: memref<128x128xi8, #tpu.memory_space<vmem>>, %arg2: memref<128x1xf32, #tpu.memory_space<vmem>>, %arg3: memref<128x128xbf16, #tpu.memory_space<vmem>>, %arg4: memref<128x128xbf16, #tpu.memory_space<vmem>>, %arg5: memref<128x128xbf16, #tpu.memory_space<vmem>>, %arg6: memref<128x128xbf16, #tpu.memory_space<vmem>>, %arg7: memref<1x128xf32, #tpu.memory_space<vmem>>, %arg8: memref<128x128xbf16, #tpu.memory_space<vmem>>) attributes {dimension_semantics = [#tpu.dimension_semantics<parallel>], iteration_bounds = array<i64: 1>, scalar_prefetch = 0 : i64, scratch_operands = 0 : i64, tpu.core_type = #tpu.core_type<tc>, window_params = [{transform_indices = @transform_0, window_bounds = array<i64: 128, 128>}, {transform_indices = @transform_1, window_bounds = array<i64: 128, 1>}, {pipeline_mode = #tpu.pipeline_mode<synchronous>, transform_indices = @transform_2, window_bounds = array<i64: 128, 128>}, {transform_indices = @transform_3, window_bounds = array<i64: 128, 128>}, {pipeline_mode = #tpu.pipeline_mode<synchronous>, transform_indices = @transform_4, window_bounds = array<i64: 128, 128>}, {pipeline_mode = #tpu.pipeline_mode<synchronous>, transform_indices = @transform_5, window_bounds = array<i64: 128, 128>}, {pipeline_mode = #tpu.pipeline_mode<synchronous>, transform_indices = @transform_6, window_bounds = array<i64: 1, 128>}, {transform_indices = @transform_7, window_bounds = array<i64: 128, 128>}]} {
    %c0 = arith.constant 0 : index
    %c0_0 = arith.constant 0 : index
    %0 = vector.load %arg1[%c0, %c0_0] : memref<128x128xi8, #tpu.memory_space<vmem>>, vector<128x128xi8>
    %1 = arith.sitofp %0 : vector<128x128xi8> to vector<128x128xbf16>
    %c0_1 = arith.constant 0 : index
    %c0_2 = arith.constant 0 : index
    %2 = vector.load %arg3[%c0_1, %c0_2] : memref<128x128xbf16, #tpu.memory_space<vmem>>, vector<128x128xbf16>
    %cst = arith.constant dense<0.000000e+00> : vector<128x128xf32>
    %3 = tpu.matmul %1, %2, %cst {dimension_numbers = #tpu.dot_dimension_numbers<[1], [0], [0], [1], [0, 0, 1, 1], [], []>} : vector<128x128xbf16>, vector<128x128xbf16>, vector<128x128xf32> -> vector<128x128xf32>
    %c0_3 = arith.constant 0 : index
    %c0_4 = arith.constant 0 : index
    %4 = vector.load %arg2[%c0_3, %c0_4] : memref<128x1xf32, #tpu.memory_space<vmem>>, vector<128x1xf32>
    %5 = vector.broadcast %4 : vector<128x1xf32> to vector<128x128xf32>
    %6 = arith.mulf %3, %5 : vector<128x128xf32>
    %7 = arith.truncf %6 : vector<128x128xf32> to vector<128x128xbf16>
    %c0_5 = arith.constant 0 : index
    %c0_6 = arith.constant 0 : index
    %8 = vector.load %arg4[%c0_5, %c0_6] : memref<128x128xbf16, #tpu.memory_space<vmem>>, vector<128x128xbf16>
    %c0_7 = arith.constant 0 : index
    %c0_8 = arith.constant 0 : index
    %9 = vector.load %arg5[%c0_7, %c0_8] : memref<128x128xbf16, #tpu.memory_space<vmem>>, vector<128x128xbf16>
    %cst_9 = arith.constant dense<0.000000e+00> : vector<128x128xf32>
    %10 = tpu.matmul %8, %9, %cst_9 {dimension_numbers = #tpu.dot_dimension_numbers<[1], [0], [0], [1], [0, 0, 1, 1], [], []>} : vector<128x128xbf16>, vector<128x128xbf16>, vector<128x128xf32> -> vector<128x128xf32>
    %c0_10 = arith.constant 0 : index
    %c0_11 = arith.constant 0 : index
    %11 = vector.load %arg6[%c0_10, %c0_11] : memref<128x128xbf16, #tpu.memory_space<vmem>>, vector<128x128xbf16>
    %cst_12 = arith.constant dense<0.000000e+00> : vector<128x128xf32>
    %12 = tpu.matmul %7, %11, %cst_12 {dimension_numbers = #tpu.dot_dimension_numbers<[1], [0], [0], [1], [0, 0, 1, 1], [], []>} : vector<128x128xbf16>, vector<128x128xbf16>, vector<128x128xf32> -> vector<128x128xf32>
    %13 = arith.addf %10, %12 : vector<128x128xf32>
    %c0_13 = arith.constant 0 : index
    %c0_14 = arith.constant 0 : index
    %14 = vector.load %arg7[%c0_13, %c0_14] : memref<1x128xf32, #tpu.memory_space<vmem>>, vector<1x128xf32>
    %15 = vector.broadcast %14 : vector<1x128xf32> to vector<128x128xf32>
    %16 = arith.addf %13, %15 : vector<128x128xf32>
    %cst_15 = arith.constant 0.000000e+00 : f32
    %17 = vector.broadcast %cst_15 : f32 to vector<128x128xf32>
    %18 = arith.maximumf %16, %17 : vector<128x128xf32>
    %19 = arith.truncf %18 : vector<128x128xf32> to vector<128x128xbf16>
    %c0_16 = arith.constant 0 : index
    %c0_17 = arith.constant 0 : index
    %20 = vector.load %arg8[%c0_16, %c0_17] : memref<128x128xbf16, #tpu.memory_space<vmem>>, vector<128x128xbf16>
    tpu.vector_store %arg8[%c0_16, %c0_17], %19 {strides = array<i32>} : memref<128x128xbf16, #tpu.memory_space<vmem>>, vector<128x128xbf16>,
    return
  }
  func.func @transform_0(%arg0: i32) -> (i32, i32) {
    %c0_i32 = arith.constant 0 : i32
    %c0_i32_0 = arith.constant 0 : i32
    return %arg0, %c0_i32 : i32, i32
  }
  func.func @transform_1(%arg0: i32) -> (i32, i32) {
    %c0_i32 = arith.constant 0 : i32
    %c0_i32_0 = arith.constant 0 : i32
    return %arg0, %c0_i32 : i32, i32
  }
  func.func @transform_2(%arg0: i32) -> (i32, i32) {
    %c0_i32 = arith.constant 0 : i32
    %c0_i32_0 = arith.constant 0 : i32
    %c0_i32_1 = arith.constant 0 : i32
    return %c0_i32, %c0_i32_0 : i32, i32
  }
  func.func @transform_3(%arg0: i32) -> (i32, i32) {
    %c0_i32 = arith.constant 0 : i32
    %c0_i32_0 = arith.constant 0 : i32
    return %arg0, %c0_i32 : i32, i32
  }
  func.func @transform_4(%arg0: i32) -> (i32, i32) {
    %c0_i32 = arith.constant 0 : i32
    %c0_i32_0 = arith.constant 0 : i32
    %c0_i32_1 = arith.constant 0 : i32
    return %c0_i32, %c0_i32_0 : i32, i32
  }
  func.func @transform_5(%arg0: i32) -> (i32, i32) {
    %c0_i32 = arith.constant 0 : i32
    %c0_i32_0 = arith.constant 0 : i32
    %c0_i32_1 = arith.constant 0 : i32
    return %c0_i32, %c0_i32_0 : i32, i32
  }
  func.func @transform_6(%arg0: i32) -> (i32, i32) {
    %c0_i32 = arith.constant 0 : i32
    %c0_i32_0 = arith.constant 0 : i32
    %c0_i32_1 = arith.constant 0 : i32
    return %c0_i32, %c0_i32_0 : i32, i32
  }
  func.func @transform_7(%arg0: i32) -> (i32, i32) {
    %c0_i32 = arith.constant 0 : i32
    %c0_i32_0 = arith.constant 0 : i32
    return %arg0, %c0_i32 : i32, i32
  }
}

</mosaic_0001>

<llo_original>
// kernel: tpu_custom_call.1
$region0: #{tpu_custom_call.1}
  #allocation0 [shape = 'u32[]', space=smem, size = 0x4, offset = 0x4, fixed_abs, tag = 'smem constant byte address 0x4 - core index']
  #allocation1 [shape = 'u32[144,128]{1,0:T(1,128)}', space=vmem, size = 0x12000, scoped, tag = 'internal scratch']
  %s0 = inlined_call_operand.hbm [shape: s8[128,128], index: 0, kind: input, shape index: {}]
  %s1 = inlined_call_operand.vmem [shape: f32[128,1], index: 1, kind: input, shape index: {}]
  %s2 = inlined_call_operand.vmem [shape: bf16[128,128], index: 2, kind: input, shape index: {}]
  %s3 = inlined_call_operand.vmem [shape: bf16[128,128], index: 3, kind: input, shape index: {}]
  %s4 = inlined_call_operand.hbm [shape: bf16[128,128], index: 4, kind: input, shape index: {}]
  %s5 = inlined_call_operand.hbm [shape: bf16[128,128], index: 5, kind: input, shape index: {}]
  %s6 = inlined_call_operand.vmem [shape: f32[1,128], index: 6, kind: input, shape index: {}]
  %s7 = inlined_call_operand.hbm [shape: bf16[128,128], index: 7, kind: output, shape index: {}]
  %s8 = sld [smem:[#allocation0]]
  $region50: #{tpu_custom_call.1} parent=0
    _
  %s10 = ssub.s32 1, %s8
  %s11 = scalar_select 0, %s10, %s8
  $region1: #{tpu_custom_call.1} parent=0
    #allocation2 [shape = 'u8[16384]{0}', space=vmem, size = 0x4000, scoped, tag = 'input window, operand 0, single buffered']
    #allocation3 [shape = 's32[1]{0}', space=sflag, size = 0x4, scoped, tag = 'scoped memory for tpu_custom_call.1']
    #allocation4 [shape = 's32[1]{0}', space=sflag, size = 0x4, scoped, tag = 'scoped memory for tpu_custom_call.1']
    #allocation5 [shape = 'u8[32768]{0}', space=vmem, size = 0x8000, scoped, tag = 'input window, operand 4, single buffered']
    #allocation6 [shape = 's32[1]{0}', space=sflag, size = 0x4, scoped, tag = 'scoped memory for tpu_custom_call.1']
    #allocation7 [shape = 'u8[32768]{0}', space=vmem, size = 0x8000, scoped, tag = 'input window, operand 5, single buffered']
    #allocation8 [shape = 'u8[32768]{0}', space=vmem, size = 0x8000, scoped, tag = 'output window, operand 0, single buffered']
    %12 = vsyncpa [#allocation3], 0
    %13 = vsyncpa [#allocation6], 0
    %14 = vsyncpa [#allocation4], 0
    // Predicated region
    $region2: #{tpu_custom_call.1} parent=1 // pred_check
      _
    $region3: #{tpu_custom_call.1} parent=1 // pred_check_branch
      %16 = sbr.rel (0) target = $region5
    $region4: #{tpu_custom_call.1} parent=1 // pred_region
      %s18 = ssub.s32 512, 512
      %19 = vsyncadd [#allocation3], %s18
      %s20 = sshll.u32 [#allocation2], 4
      %s21 = int_to_ptr.vmem [resolvable:$true] %s20
      %26 = dma.hbm_to_vmem [thread:$0]  %s0, 512, %s21, [#allocation3], 128, 128, 8
    $region5: #{tpu_custom_call.1} parent=1 // pred_fallthru
      _
    // Predicated region
    $region6: #{tpu_custom_call.1} parent=1 // pred_check
      _
    $region7: #{tpu_custom_call.1} parent=1 // pred_check_branch
      %28 = sbr.rel (0) target = $region9
    $region8: #{tpu_custom_call.1} parent=1 // pred_region
      _
    $region9: #{tpu_custom_call.1} parent=1 // pred_fallthru
      _
    // Predicated region
    $region10: #{tpu_custom_call.1} parent=1 // pred_check
      _
    $region11: #{tpu_custom_call.1} parent=1 // pred_check_branch
      %30 = sbr.rel (0) target = $region13
    $region12: #{tpu_custom_call.1} parent=1 // pred_region
      _
    $region13: #{tpu_custom_call.1} parent=1 // pred_fallthru
      _
    // Predicated region
    $region14: #{tpu_custom_call.1} parent=1 // pred_check
      _
    $region15: #{tpu_custom_call.1} parent=1 // pred_check_branch
      %32 = sbr.rel (0) target = $region17
    $region16: #{tpu_custom_call.1} parent=1 // pred_region
      _
    $region17: #{tpu_custom_call.1} parent=1 // pred_fallthru
      _
    // Predicated region
    $region18: #{tpu_custom_call.1} parent=1 // pred_check
      _
    $region19: #{tpu_custom_call.1} parent=1 // pred_check_branch
      %34 = sbr.rel (0) target = $region21
    $region20: #{tpu_custom_call.1} parent=1 // pred_region
      %s36 = ssub.s32 1024, 1024
      %37 = vsyncadd [#allocation6], %s36
      %s38 = sshll.u32 [#allocation5], 4
      %s39 = int_to_ptr.vmem [resolvable:$true] %s38
      %44 = dma.hbm_to_vmem [thread:$0]  %s4, 1024, %s39, [#allocation6], 64, 64, 4
    $region21: #{tpu_custom_call.1} parent=1 // pred_fallthru
      _
    // Predicated region
    $region22: #{tpu_custom_call.1} parent=1 // pred_check
      _
    $region23: #{tpu_custom_call.1} parent=1 // pred_check_branch
      %46 = sbr.rel (0) target = $region25
    $region24: #{tpu_custom_call.1} parent=1 // pred_region
      %s48 = ssub.s32 1024, 1024
      %49 = vsyncadd [#allocation6], %s48
      %s50 = sshll.u32 [#allocation7], 4
      %s51 = int_to_ptr.vmem [resolvable:$true] %s50
      %56 = dma.hbm_to_vmem [thread:$0]  %s5, 1024, %s51, [#allocation6], 64, 64, 4
    $region25: #{tpu_custom_call.1} parent=1 // pred_fallthru
      _
    // Predicated region
    $region26: #{tpu_custom_call.1} parent=1 // pred_check
      _
    $region27: #{tpu_custom_call.1} parent=1 // pred_check_branch
      %58 = sbr.rel (0) target = $region29
    $region28: #{tpu_custom_call.1} parent=1 // pred_region
      _
    $region29: #{tpu_custom_call.1} parent=1 // pred_fallthru
      _
    // Predicated region
    $region30: #{tpu_custom_call.1} parent=1 // pred_check
      _
    $region31: #{tpu_custom_call.1} parent=1 // pred_check_branch
      %60 = sbr.rel (0) target = $region33
    $region32: #{tpu_custom_call.1} parent=1 // pred_region
      %61 = dma.done [#allocation3], 512
    $region33: #{tpu_custom_call.1} parent=1 // pred_fallthru
      _
    // Predicated region
    $region34: #{tpu_custom_call.1} parent=1 // pred_check
      _
    $region35: #{tpu_custom_call.1} parent=1 // pred_check_branch
      %63 = sbr.rel (0) target = $region37
    $region36: #{tpu_custom_call.1} parent=1 // pred_region
      %64 = dma.done [#allocation6], 1024
    $region37: #{tpu_custom_call.1} parent=1 // pred_fallthru
      _
    // Predicated region
    $region38: #{tpu_custom_call.1} parent=1 // pred_check
      _
    $region39: #{tpu_custom_call.1} parent=1 // pred_check_branch
      %66 = sbr.rel (0) target = $region41
    $region40: #{tpu_custom_call.1} parent=1 // pred_region
      %67 = dma.done [#allocation6], 1024
    $region41: #{tpu_custom_call.1} parent=1 // pred_fallthru
      _
    %v69 = vld [vmem:[#allocation2] sm:$0xff]
    %v70 = vld [vmem:[#allocation2 + $0x8] sm:$0xff]
    %v71 = vld [vmem:[#allocation2 + $0x10] sm:$0xff]
    %v72 = vld [vmem:[#allocation2 + $0x18] sm:$0xff]
    %v73 = vunpack.c.l.s8.bf16 %v69
    %v74 = vunpack.c.h.s8.bf16 %v69
    %v75 = vunpack.c.l.s8.bf16 %v70
    %v76 = vunpack.c.h.s8.bf16 %v70
    %v77 = vunpack.c.l.s8.bf16 %v71
    %v78 = vunpack.c.h.s8.bf16 %v71
    %v79 = vunpack.c.l.s8.bf16 %v72
    %v80 = vunpack.c.h.s8.bf16 %v72
    %v81 = vld [vmem:[%s2] sm:$0xf]
    %v82 = vld [vmem:[%s2 + $0x4] sm:$0xf]
    %v83 = vld [vmem:[%s2 + $0x8] sm:$0xf]
    %v84 = vld [vmem:[%s2 + $0xc] sm:$0xf]
    %v85 = vld [vmem:[%s2 + $0x10] sm:$0xf]
    %v86 = vld [vmem:[%s2 + $0x14] sm:$0xf]
    %v87 = vld [vmem:[%s2 + $0x18] sm:$0xf]
    %v88 = vld [vmem:[%s2 + $0x1c] sm:$0xf]
    %v89 = vld [vmem:[%s2 + $0x20] sm:$0xf]
    %v90 = vld [vmem:[%s2 + $0x24] sm:$0xf]
    %v91 = vld [vmem:[%s2 + $0x28] sm:$0xf]
    %v92 = vld [vmem:[%s2 + $0x2c] sm:$0xf]
    %v93 = vld [vmem:[%s2 + $0x30] sm:$0xf]
    %v94 = vld [vmem:[%s2 + $0x34] sm:$0xf]
    %v95 = vld [vmem:[%s2 + $0x38] sm:$0xf]
    %v96 = vld [vmem:[%s2 + $0x3c] sm:$0xf]
    %v113 = vunpack.c.l.b16 %v81
    %v114 = vunpack.c.l.b16 %v82
    %v115 = vunpack.c.l.b16 %v83
    %v116 = vunpack.c.l.b16 %v84
    %v117 = vunpack.c.l.b16 %v85
    %v118 = vunpack.c.l.b16 %v86
    %v119 = vunpack.c.l.b16 %v87
    %v120 = vunpack.c.l.b16 %v88
    %v121 = vunpack.c.l.b16 %v89
    %v122 = vunpack.c.l.b16 %v90
    %v123 = vunpack.c.l.b16 %v91
    %v124 = vunpack.c.l.b16 %v92
    %v125 = vunpack.c.l.b16 %v93
    %v126 = vunpack.c.l.b16 %v94
    %v127 = vunpack.c.l.b16 %v95
    %v128 = vunpack.c.l.b16 %v96
    %v129 = vpack.c.b16 %v114, %v113
    %v130 = vpack.c.b16 %v116, %v115
    %v131 = vpack.c.b16 %v118, %v117
    %v132 = vpack.c.b16 %v120, %v119
    %v133 = vpack.c.b16 %v122, %v121
    %v134 = vpack.c.b16 %v124, %v123
    %v135 = vpack.c.b16 %v126, %v125
    %v136 = vpack.c.b16 %v128, %v127
    %145 = vmatprep.subr.bf16.mxu0 0
    %146 = vmatpush1.bf16.msra.mxu0 %v129
    %147 = vmatprep.subr.bf16.mxu0 0
    %148 = vmatpush1.bf16.msra.mxu0 %v130
    %149 = vmatprep.subr.bf16.mxu0 0
    %150 = vmatpush1.bf16.msra.mxu0 %v131
    %151 = vmatprep.subr.bf16.mxu0 0
    %152 = vmatpush1.bf16.msra.mxu0 %v132
    %153 = vmatprep.subr.bf16.mxu0 0
    %154 = vmatpush1.bf16.msra.mxu0 %v133
    %155 = vmatprep.subr.bf16.mxu0 0
    %156 = vmatpush1.bf16.msra.mxu0 %v134
    %157 = vmatprep.subr.bf16.mxu0 0
    %158 = vmatpush1.bf16.msra.mxu0 %v135
    %159 = vmatprep.subr.bf16.mxu0 0
    %160 = vmatpush1.bf16.msra.mxu0 %v136
    %161 = vmatprep.subr.bf16.mxu0 0
    %162 = vmatpush1.bf16.msra.mxu0 0
    %163 = vmatprep.subr.bf16.mxu0 0
    %164 = vmatpush1.bf16.msra.mxu0 0
    %165 = vmatprep.subr.bf16.mxu0 0
    %166 = vmatpush1.bf16.msra.mxu0 0
    %167 = vmatprep.subr.bf16.mxu0 0
    %168 = vmatpush1.bf16.msra.mxu0 0
    %169 = vmatprep.subr.bf16.mxu0 0
    %170 = vmatpush1.bf16.msra.mxu0 0
    %171 = vmatprep.subr.bf16.mxu0 0
    %172 = vmatpush1.bf16.msra.mxu0 0
    %173 = vmatprep.subr.bf16.mxu0 0
    %174 = vmatpush1.bf16.msra.mxu0 0
    %175 = vmatprep.subr.bf16.mxu0 0
    %176 = vmatpush1.bf16.msra.mxu0 0
    %177 = vmatprep.mubr.bf16.mxu0 0
    %178 = vmatmul.mubr.bf16.gmra.mrb[0].mxu0 %v73
    %v179 = vpop.f32.mrb[0].mxu0
    %v180 = vadd.f32 0.0, %v179
    %v181 = vpop.f32.mrb[0].mxu0
    %v182 = vpop.f32.mrb[0].mxu0
    %v183 = vadd.f32 0.0, %v182
    %v184 = vpop.f32.mrb[0].mxu0
    %185 = vmatprep.mubr.bf16.mxu0 0
    %186 = vmatmul.mubr.bf16.gmra.mrb[0].mxu0 %v74
    %v187 = vpop.f32.mrb[0].mxu0
    %v188 = vadd.f32 0.0, %v187
    %v189 = vpop.f32.mrb[0].mxu0
    %v190 = vpop.f32.mrb[0].mxu0
    %v191 = vadd.f32 0.0, %v190
    %v192 = vpop.f32.mrb[0].mxu0
    %193 = vmatprep.mubr.bf16.mxu0 0
    %194 = vmatmul.mubr.bf16.gmra.mrb[0].mxu0 %v75
    %v195 = vpop.f32.mrb[0].mxu0
    %v196 = vadd.f32 0.0, %v195
    %v197 = vpop.f32.mrb[0].mxu0
    %v198 = vpop.f32.mrb[0].mxu0
    %v199 = vadd.f32 0.0, %v198
    %v200 = vpop.f32.mrb[0].mxu0
    %201 = vmatprep.mubr.bf16.mxu0 0
    %202 = vmatmul.mubr.bf16.gmra.mrb[0].mxu0 %v76
    %v203 = vpop.f32.mrb[0].mxu0
    %v204 = vadd.f32 0.0, %v203
    %v205 = vpop.f32.mrb[0].mxu0
    %v206 = vpop.f32.mrb[0].mxu0
    %v207 = vadd.f32 0.0, %v206
    %v208 = vpop.f32.mrb[0].mxu0
    %209 = vmatprep.mubr.bf16.mxu0 0
    %210 = vmatmul.mubr.bf16.gmra.mrb[0].mxu0 %v77
    %v211 = vpop.f32.mrb[0].mxu0
    %v212 = vadd.f32 0.0, %v211
    %v213 = vpop.f32.mrb[0].mxu0
    %v214 = vpop.f32.mrb[0].mxu0
    %v215 = vadd.f32 0.0, %v214
    %v216 = vpop.f32.mrb[0].mxu0
    %217 = vmatprep.mubr.bf16.mxu0 0
    %218 = vmatmul.mubr.bf16.gmra.mrb[0].mxu0 %v78
    %v219 = vpop.f32.mrb[0].mxu0
    %v220 = vadd.f32 0.0, %v219
    %v221 = vpop.f32.mrb[0].mxu0
    %v222 = vpop.f32.mrb[0].mxu0
    %v223 = vadd.f32 0.0, %v222
    %v224 = vpop.f32.mrb[0].mxu0
    %225 = vmatprep.mubr.bf16.mxu0 0
    %226 = vmatmul.mubr.bf16.gmra.mrb[0].mxu0 %v79
    %v227 = vpop.f32.mrb[0].mxu0
    %v228 = vadd.f32 0.0, %v227
    %v229 = vpop.f32.mrb[0].mxu0
    %v230 = vpop.f32.mrb[0].mxu0
    %v231 = vadd.f32 0.0, %v230
    %v232 = vpop.f32.mrb[0].mxu0
    %233 = vmatprep.mubr.bf16.mxu0 0
    %234 = vmatmul.mubr.bf16.gmra.mrb[0].mxu0 %v80
    %v235 = vpop.f32.mrb[0].mxu0
    %v236 = vadd.f32 0.0, %v235
    %v237 = vpop.f32.mrb[0].mxu0
    %v238 = vpop.f32.mrb[0].mxu0
    %v239 = vadd.f32 0.0, %v238
    %v240 = vpop.f32.mrb[0].mxu0
    %241 = vdwg.mxu0
    %v242 = vld [vmem:[%s1] sm:$0xff]
    %v243 = vld [vmem:[%s1 + $0x8] sm:$0xff]
    %v244 = vld [vmem:[%s1 + $0x10] sm:$0xff]
    %v245 = vld [vmem:[%s1 + $0x18] sm:$0xff]
    %v246 = vld [vmem:[%s1 + $0x20] sm:$0xff]
    %v247 = vld [vmem:[%s1 + $0x28] sm:$0xff]
    %v248 = vld [vmem:[%s1 + $0x30] sm:$0xff]
    %v249 = vld [vmem:[%s1 + $0x38] sm:$0xff]
    %v250 = vld [vmem:[%s1 + $0x40] sm:$0xff]
    %v251 = vld [vmem:[%s1 + $0x48] sm:$0xff]
    %v252 = vld [vmem:[%s1 + $0x50] sm:$0xff]
    %v253 = vld [vmem:[%s1 + $0x58] sm:$0xff]
    %v254 = vld [vmem:[%s1 + $0x60] sm:$0xff]
    %v255 = vld [vmem:[%s1 + $0x68] sm:$0xff]
    %v256 = vld [vmem:[%s1 + $0x70] sm:$0xff]
    %v257 = vld [vmem:[%s1 + $0x78] sm:$0xff]
    %259 = vset.pattern.permute.xlu0 0
    %260 = vperm.xlu0 %259, %v242
    %v261 = vpop.permute.xlu0 %260
    %264 = vset.pattern.permute.xlu0 0
    %265 = vperm.xlu0 %264, %v243
    %v266 = vpop.permute.xlu0 %265
    %269 = vset.pattern.permute.xlu0 0
    %270 = vperm.xlu0 %269, %v244
    %v271 = vpop.permute.xlu0 %270
    %274 = vset.pattern.permute.xlu0 0
    %275 = vperm.xlu0 %274, %v245
    %v276 = vpop.permute.xlu0 %275
    %279 = vset.pattern.permute.xlu0 0
    %280 = vperm.xlu0 %279, %v246
    %v281 = vpop.permute.xlu0 %280
    %284 = vset.pattern.permute.xlu0 0
    %285 = vperm.xlu0 %284, %v247
    %v286 = vpop.permute.xlu0 %285
    %289 = vset.pattern.permute.xlu0 0
    %290 = vperm.xlu0 %289, %v248
    %v291 = vpop.permute.xlu0 %290
    %294 = vset.pattern.permute.xlu0 0
    %295 = vperm.xlu0 %294, %v249
    %v296 = vpop.permute.xlu0 %295
    %299 = vset.pattern.permute.xlu0 0
    %300 = vperm.xlu0 %299, %v250
    %v301 = vpop.permute.xlu0 %300
    %304 = vset.pattern.permute.xlu0 0
    %305 = vperm.xlu0 %304, %v251
    %v306 = vpop.permute.xlu0 %305
    %309 = vset.pattern.permute.xlu0 0
    %310 = vperm.xlu0 %309, %v252
    %v311 = vpop.permute.xlu0 %310
    %314 = vset.pattern.permute.xlu0 0
    %315 = vperm.xlu0 %314, %v253
    %v316 = vpop.permute.xlu0 %315
    %319 = vset.pattern.permute.xlu0 0
    %320 = vperm.xlu0 %319, %v254
    %v321 = vpop.permute.xlu0 %320
    %324 = vset.pattern.permute.xlu0 0
    %325 = vperm.xlu0 %324, %v255
    %v326 = vpop.permute.xlu0 %325
    %329 = vset.pattern.permute.xlu0 0
    %330 = vperm.xlu0 %329, %v256
    %v331 = vpop.permute.xlu0 %330
    %334 = vset.pattern.permute.xlu0 0
    %335 = vperm.xlu0 %334, %v257
    %v336 = vpop.permute.xlu0 %335
    %v338 = vmul.f32 %v180, %v261
    %v339 = vmul.f32 %v183, %v266
    %v340 = vmul.f32 %v188, %v271
    %v341 = vmul.f32 %v191, %v276
    %v342 = vmul.f32 %v196, %v281
    %v343 = vmul.f32 %v199, %v286
    %v344 = vmul.f32 %v204, %v291
    %v345 = vmul.f32 %v207, %v296
    %v346 = vmul.f32 %v212, %v301
    %v347 = vmul.f32 %v215, %v306
    %v348 = vmul.f32 %v220, %v311
    %v349 = vmul.f32 %v223, %v316
    %v350 = vmul.f32 %v228, %v321
    %v351 = vmul.f32 %v231, %v326
    %v352 = vmul.f32 %v236, %v331
    %v353 = vmul.f32 %v239, %v336
    %v354 = vpack.c.bf16 %v339, %v338
    %v355 = vpack.c.bf16 %v341, %v340
    %v356 = vpack.c.bf16 %v343, %v342
    %v357 = vpack.c.bf16 %v345, %v344
    %v358 = vpack.c.bf16 %v347, %v346
    %v359 = vpack.c.bf16 %v349, %v348
    %v360 = vpack.c.bf16 %v351, %v350
    %v361 = vpack.c.bf16 %v353, %v352
    %v362 = vld [vmem:[%s3] sm:$0xf]
    %v363 = vld [vmem:[%s3 + $0x4] sm:$0xf]
    %v364 = vld [vmem:[%s3 + $0x8] sm:$0xf]
    %v365 = vld [vmem:[%s3 + $0xc] sm:$0xf]
    %v366 = vld [vmem:[%s3 + $0x10] sm:$0xf]
    %v367 = vld [vmem:[%s3 + $0x14] sm:$0xf]
    %v368 = vld [vmem:[%s3 + $0x18] sm:$0xf]
    %v369 = vld [vmem:[%s3 + $0x1c] sm:$0xf]
    %v370 = vld [vmem:[%s3 + $0x20] sm:$0xf]
    %v371 = vld [vmem:[%s3 + $0x24] sm:$0xf]
    %v372 = vld [vmem:[%s3 + $0x28] sm:$0xf]
    %v373 = vld [vmem:[%s3 + $0x2c] sm:$0xf]
    %v374 = vld [vmem:[%s3 + $0x30] sm:$0xf]
    %v375 = vld [vmem:[%s3 + $0x34] sm:$0xf]
    %v376 = vld [vmem:[%s3 + $0x38] sm:$0xf]
    %v377 = vld [vmem:[%s3 + $0x3c] sm:$0xf]
    %v378 = vld [vmem:[#allocation5] sm:$0xf]
    %v379 = vld [vmem:[#allocation5 + $0x4] sm:$0xf]
    %v380 = vld [vmem:[#allocation5 + $0x8] sm:$0xf]
    %v381 = vld [vmem:[#allocation5 + $0xc] sm:$0xf]
    %v382 = vld [vmem:[#allocation5 + $0x10] sm:$0xf]
    %v383 = vld [vmem:[#allocation5 + $0x14] sm:$0xf]
    %v384 = vld [vmem:[#allocation5 + $0x18] sm:$0xf]
    %v385 = vld [vmem:[#allocation5 + $0x1c] sm:$0xf]
    %v386 = vld [vmem:[#allocation5 + $0x20] sm:$0xf]
    %v387 = vld [vmem:[#allocation5 + $0x24] sm:$0xf]
    %v388 = vld [vmem:[#allocation5 + $0x28] sm:$0xf]
    %v389 = vld [vmem:[#allocation5 + $0x2c] sm:$0xf]
    %v390 = vld [vmem:[#allocation5 + $0x30] sm:$0xf]
    %v391 = vld [vmem:[#allocation5 + $0x34] sm:$0xf]
    %v392 = vld [vmem:[#allocation5 + $0x38] sm:$0xf]
    %v393 = vld [vmem:[#allocation5 + $0x3c] sm:$0xf]
    %v394 = vld [vmem:[#allocation7] sm:$0xf]
    %v395 = vld [vmem:[#allocation7 + $0x4] sm:$0xf]
    %v396 = vld [vmem:[#allocation7 + $0x8] sm:$0xf]
    %v397 = vld [vmem:[#allocation7 + $0xc] sm:$0xf]
    %v398 = vld [vmem:[#allocation7 + $0x10] sm:$0xf]
    %v399 = vld [vmem:[#allocation7 + $0x14] sm:$0xf]
    %v400 = vld [vmem:[#allocation7 + $0x18] sm:$0xf]
    %v401 = vld [vmem:[#allocation7 + $0x1c] sm:$0xf]
    %v402 = vld [vmem:[#allocation7 + $0x20] sm:$0xf]
    %v403 = vld [vmem:[#allocation7 + $0x24] sm:$0xf]
    %v404 = vld [vmem:[#allocation7 + $0x28] sm:$0xf]
    %v405 = vld [vmem:[#allocation7 + $0x2c] sm:$0xf]
    %v406 = vld [vmem:[#allocation7 + $0x30] sm:$0xf]
    %v407 = vld [vmem:[#allocation7 + $0x34] sm:$0xf]
    %v408 = vld [vmem:[#allocation7 + $0x38] sm:$0xf]
    %v409 = vld [vmem:[#allocation7 + $0x3c] sm:$0xf]
    %v426 = vunpack.c.l.b16 %v394
    %v427 = vunpack.c.l.b16 %v395
    %v428 = vunpack.c.l.b16 %v396
    %v429 = vunpack.c.l.b16 %v397
    %v430 = vunpack.c.l.b16 %v398
    %v431 = vunpack.c.l.b16 %v399
    %v432 = vunpack.c.l.b16 %v400
    %v433 = vunpack.c.l.b16 %v401
    %v434 = vunpack.c.l.b16 %v402
    %v435 = vunpack.c.l.b16 %v403
    %v436 = vunpack.c.l.b16 %v404
    %v437 = vunpack.c.l.b16 %v405
    %v438 = vunpack.c.l.b16 %v406
    %v439 = vunpack.c.l.b16 %v407
    %v440 = vunpack.c.l.b16 %v408
    %v441 = vunpack.c.l.b16 %v409
    %v442 = vpack.c.b16 %v427, %v426
    %v443 = vpack.c.b16 %v429, %v428
    %v444 = vpack.c.b16 %v431, %v430
    %v445 = vpack.c.b16 %v433, %v432
    %v446 = vpack.c.b16 %v435, %v434
    %v447 = vpack.c.b16 %v437, %v436
    %v448 = vpack.c.b16 %v439, %v438
    %v449 = vpack.c.b16 %v441, %v440
    %458 = vmatprep.subr.bf16.mxu0 0
    %459 = vmatpush1.bf16.msra.mxu0 %v442
    %460 = vmatprep.subr.bf16.mxu0 0
    %461 = vmatpush1.bf16.msra.mxu0 %v443
    %462 = vmatprep.subr.bf16.mxu0 0
    %463 = vmatpush1.bf16.msra.mxu0 %v444
    %464 = vmatprep.subr.bf16.mxu0 0
    %465 = vmatpush1.bf16.msra.mxu0 %v445
    %466 = vmatprep.subr.bf16.mxu0 0
    %467 = vmatpush1.bf16.msra.mxu0 %v446
    %468 = vmatprep.subr.bf16.mxu0 0
    %469 = vmatpush1.bf16.msra.mxu0 %v447
    %470 = vmatprep.subr.bf16.mxu0 0
    %471 = vmatpush1.bf16.msra.mxu0 %v448
    %472 = vmatprep.subr.bf16.mxu0 0
    %473 = vmatpush1.bf16.msra.mxu0 %v449
    %474 = vmatprep.subr.bf16.mxu0 0
    %475 = vmatpush1.bf16.msra.mxu0 0
    %476 = vmatprep.subr.bf16.mxu0 0
    %477 = vmatpush1.bf16.msra.mxu0 0
    %478 = vmatprep.subr.bf16.mxu0 0
    %479 = vmatpush1.bf16.msra.mxu0 0
    %480 = vmatprep.subr.bf16.mxu0 0
    %481 = vmatpush1.bf16.msra.mxu0 0
    %482 = vmatprep.subr.bf16.mxu0 0
    %483 = vmatpush1.bf16.msra.mxu0 0
    %484 = vmatprep.subr.bf16.mxu0 0
    %485 = vmatpush1.bf16.msra.mxu0 0
    %486 = vmatprep.subr.bf16.mxu0 0
    %487 = vmatpush1.bf16.msra.mxu0 0
    %488 = vmatprep.subr.bf16.mxu0 0
    %489 = vmatpush1.bf16.msra.mxu0 0
    %490 = vmatprep.mubr.bf16.mxu0 0
    %491 = vmatmul.mubr.bf16.gmra.mrb[0].mxu0 %v354
    %v492 = vpop.f32.mrb[0].mxu0
    %v493 = vadd.f32 0.0, %v492
    %v494 = vpop.f32.mrb[0].mxu0
    %v495 = vpop.f32.mrb[0].mxu0
    %v496 = vadd.f32 0.0, %v495
    %v497 = vpop.f32.mrb[0].mxu0
    %498 = vmatprep.mubr.bf16.mxu0 0
    %499 = vmatmul.mubr.bf16.gmra.mrb[0].mxu0 %v355
    %v500 = vpop.f32.mrb[0].mxu0
    %v501 = vadd.f32 0.0, %v500
    %v502 = vpop.f32.mrb[0].mxu0
    %v503 = vpop.f32.mrb[0].mxu0
    %v504 = vadd.f32 0.0, %v503
    %v505 = vpop.f32.mrb[0].mxu0
    %506 = vmatprep.mubr.bf16.mxu0 0
    %507 = vmatmul.mubr.bf16.gmra.mrb[0].mxu0 %v356
    %v508 = vpop.f32.mrb[0].mxu0
    %v509 = vadd.f32 0.0, %v508
    %v510 = vpop.f32.mrb[0].mxu0
    %v511 = vpop.f32.mrb[0].mxu0
    %v512 = vadd.f32 0.0, %v511
    %v513 = vpop.f32.mrb[0].mxu0
    %514 = vmatprep.mubr.bf16.mxu0 0
    %515 = vmatmul.mubr.bf16.gmra.mrb[0].mxu0 %v357
    %v516 = vpop.f32.mrb[0].mxu0
    %v517 = vadd.f32 0.0, %v516
    %v518 = vpop.f32.mrb[0].mxu0
    %v519 = vpop.f32.mrb[0].mxu0
    %v520 = vadd.f32 0.0, %v519
    %v521 = vpop.f32.mrb[0].mxu0
    %522 = vmatprep.mubr.bf16.mxu0 0
    %523 = vmatmul.mubr.bf16.gmra.mrb[0].mxu0 %v358
    %v524 = vpop.f32.mrb[0].mxu0
    %v525 = vadd.f32 0.0, %v524
    %v526 = vpop.f32.mrb[0].mxu0
    %v527 = vpop.f32.mrb[0].mxu0
    %v528 = vadd.f32 0.0, %v527
    %v529 = vpop.f32.mrb[0].mxu0
    %530 = vmatprep.mubr.bf16.mxu0 0
    %531 = vmatmul.mubr.bf16.gmra.mrb[0].mxu0 %v359
    %v532 = vpop.f32.mrb[0].mxu0
    %v533 = vadd.f32 0.0, %v532
    %v534 = vpop.f32.mrb[0].mxu0
    %v535 = vpop.f32.mrb[0].mxu0
    %v536 = vadd.f32 0.0, %v535
    %v537 = vpop.f32.mrb[0].mxu0
    %538 = vmatprep.mubr.bf16.mxu0 0
    %539 = vmatmul.mubr.bf16.gmra.mrb[0].mxu0 %v360
    %v540 = vpop.f32.mrb[0].mxu0
    %v541 = vadd.f32 0.0, %v540
    %v542 = vpop.f32.mrb[0].mxu0
    %v543 = vpop.f32.mrb[0].mxu0
    %v544 = vadd.f32 0.0, %v543
    %v545 = vpop.f32.mrb[0].mxu0
    %546 = vmatprep.mubr.bf16.mxu0 0
    %547 = vmatmul.mubr.bf16.gmra.mrb[0].mxu0 %v361
    %v548 = vpop.f32.mrb[0].mxu0
    %v549 = vadd.f32 0.0, %v548
    %v550 = vpop.f32.mrb[0].mxu0
    %v551 = vpop.f32.mrb[0].mxu0
    %v552 = vadd.f32 0.0, %v551
    %v553 = vpop.f32.mrb[0].mxu0
    %554 = vdwg.mxu0
    %v571 = vunpack.c.l.b16 %v362
    %v572 = vunpack.c.l.b16 %v363
    %v573 = vunpack.c.l.b16 %v364
    %v574 = vunpack.c.l.b16 %v365
    %v575 = vunpack.c.l.b16 %v366
    %v576 = vunpack.c.l.b16 %v367
    %v577 = vunpack.c.l.b16 %v368
    %v578 = vunpack.c.l.b16 %v369
    %v579 = vunpack.c.l.b16 %v370
    %v580 = vunpack.c.l.b16 %v371
    %v581 = vunpack.c.l.b16 %v372
    %v582 = vunpack.c.l.b16 %v373
    %v583 = vunpack.c.l.b16 %v374
    %v584 = vunpack.c.l.b16 %v375
    %v585 = vunpack.c.l.b16 %v376
    %v586 = vunpack.c.l.b16 %v377
    %v587 = vpack.c.b16 %v572, %v571
    %v588 = vpack.c.b16 %v574, %v573
    %v589 = vpack.c.b16 %v576, %v575
    %v590 = vpack.c.b16 %v578, %v577
    %v591 = vpack.c.b16 %v580, %v579
    %v592 = vpack.c.b16 %v582, %v581
    %v593 = vpack.c.b16 %v584, %v583
    %v594 = vpack.c.b16 %v586, %v585
    %v619 = vunpack.c.l.b16 %v378
    %v620 = vunpack.c.l.b16 %v379
    %v621 = vunpack.c.l.b16 %v380
    %v622 = vunpack.c.l.b16 %v381
    %v623 = vunpack.c.l.b16 %v382
    %v624 = vunpack.c.l.b16 %v383
    %v625 = vunpack.c.l.b16 %v384
    %v626 = vunpack.c.l.b16 %v385
    %v627 = vunpack.c.l.b16 %v386
    %v628 = vunpack.c.l.b16 %v387
    %v629 = vunpack.c.l.b16 %v388
    %v630 = vunpack.c.l.b16 %v389
    %v631 = vunpack.c.l.b16 %v390
    %v632 = vunpack.c.l.b16 %v391
    %v633 = vunpack.c.l.b16 %v392
    %v634 = vunpack.c.l.b16 %v393
    %v635 = vpack.c.b16 %v620, %v619
    %v636 = vpack.c.b16 %v622, %v621
    %v637 = vpack.c.b16 %v624, %v623
    %v638 = vpack.c.b16 %v626, %v625
    %v639 = vpack.c.b16 %v628, %v627
    %v640 = vpack.c.b16 %v630, %v629
    %v641 = vpack.c.b16 %v632, %v631
    %v642 = vpack.c.b16 %v634, %v633
    %651 = vmatprep.subr.bf16.mxu0 0
    %652 = vmatpush1.bf16.msra.mxu0 %v635
    %653 = vmatprep.subr.bf16.mxu0 0
    %654 = vmatpush1.bf16.msra.mxu0 %v636
    %655 = vmatprep.subr.bf16.mxu0 0
    %656 = vmatpush1.bf16.msra.mxu0 %v637
    %657 = vmatprep.subr.bf16.mxu0 0
    %658 = vmatpush1.bf16.msra.mxu0 %v638
    %659 = vmatprep.subr.bf16.mxu0 0
    %660 = vmatpush1.bf16.msra.mxu0 %v639
    %661 = vmatprep.subr.bf16.mxu0 0
    %662 = vmatpush1.bf16.msra.mxu0 %v640
    %663 = vmatprep.subr.bf16.mxu0 0
    %664 = vmatpush1.bf16.msra.mxu0 %v641
    %665 = vmatprep.subr.bf16.mxu0 0
    %666 = vmatpush1.bf16.msra.mxu0 %v642
    %667 = vmatprep.subr.bf16.mxu0 0
    %668 = vmatpush1.bf16.msra.mxu0 0
    %669 = vmatprep.subr.bf16.mxu0 0
    %670 = vmatpush1.bf16.msra.mxu0 0
    %671 = vmatprep.subr.bf16.mxu0 0
    %672 = vmatpush1.bf16.msra.mxu0 0
    %673 = vmatprep.subr.bf16.mxu0 0
    %674 = vmatpush1.bf16.msra.mxu0 0
    %675 = vmatprep.subr.bf16.mxu0 0
    %676 = vmatpush1.bf16.msra.mxu0 0
    %677 = vmatprep.subr.bf16.mxu0 0
    %678 = vmatpush1.bf16.msra.mxu0 0
    %679 = vmatprep.subr.bf16.mxu0 0
    %680 = vmatpush1.bf16.msra.mxu0 0
    %681 = vmatprep.subr.bf16.mxu0 0
    %682 = vmatpush1.bf16.msra.mxu0 0
    %683 = vmatprep.mubr.bf16.mxu0 0
    %684 = vmatmul.mubr.bf16.gmra.mrb[0].mxu0 %v587
    %v685 = vpop.f32.mrb[0].mxu0
    %v686 = vadd.f32 %v493, %v685
    %v687 = vpop.f32.mrb[0].mxu0
    %v688 = vpop.f32.mrb[0].mxu0
    %v689 = vadd.f32 %v496, %v688
    %v690 = vpop.f32.mrb[0].mxu0
    %691 = vmatprep.mubr.bf16.mxu0 0
    %692 = vmatmul.mubr.bf16.gmra.mrb[0].mxu0 %v588
    %v693 = vpop.f32.mrb[0].mxu0
    %v694 = vadd.f32 %v501, %v693
    %v695 = vpop.f32.mrb[0].mxu0
    %v696 = vpop.f32.mrb[0].mxu0
    %v697 = vadd.f32 %v504, %v696
    %v698 = vpop.f32.mrb[0].mxu0
    %699 = vmatprep.mubr.bf16.mxu0 0
    %700 = vmatmul.mubr.bf16.gmra.mrb[0].mxu0 %v589
    %v701 = vpop.f32.mrb[0].mxu0
    %v702 = vadd.f32 %v509, %v701
    %v703 = vpop.f32.mrb[0].mxu0
    %v704 = vpop.f32.mrb[0].mxu0
    %v705 = vadd.f32 %v512, %v704
    %v706 = vpop.f32.mrb[0].mxu0
    %707 = vmatprep.mubr.bf16.mxu0 0
    %708 = vmatmul.mubr.bf16.gmra.mrb[0].mxu0 %v590
    %v709 = vpop.f32.mrb[0].mxu0
    %v710 = vadd.f32 %v517, %v709
    %v711 = vpop.f32.mrb[0].mxu0
    %v712 = vpop.f32.mrb[0].mxu0
    %v713 = vadd.f32 %v520, %v712
    %v714 = vpop.f32.mrb[0].mxu0
    %715 = vmatprep.mubr.bf16.mxu0 0
    %716 = vmatmul.mubr.bf16.gmra.mrb[0].mxu0 %v591
    %v717 = vpop.f32.mrb[0].mxu0
    %v718 = vadd.f32 %v525, %v717
    %v719 = vpop.f32.mrb[0].mxu0
    %v720 = vpop.f32.mrb[0].mxu0
    %v721 = vadd.f32 %v528, %v720
    %v722 = vpop.f32.mrb[0].mxu0
    %723 = vmatprep.mubr.bf16.mxu0 0
    %724 = vmatmul.mubr.bf16.gmra.mrb[0].mxu0 %v592
    %v725 = vpop.f32.mrb[0].mxu0
    %v726 = vadd.f32 %v533, %v725
    %v727 = vpop.f32.mrb[0].mxu0
    %v728 = vpop.f32.mrb[0].mxu0
    %v729 = vadd.f32 %v536, %v728
    %v730 = vpop.f32.mrb[0].mxu0
    %731 = vmatprep.mubr.bf16.mxu0 0
    %732 = vmatmul.mubr.bf16.gmra.mrb[0].mxu0 %v593
    %v733 = vpop.f32.mrb[0].mxu0
    %v734 = vadd.f32 %v541, %v733
    %v735 = vpop.f32.mrb[0].mxu0
    %v736 = vpop.f32.mrb[0].mxu0
    %v737 = vadd.f32 %v544, %v736
    %v738 = vpop.f32.mrb[0].mxu0
    %739 = vmatprep.mubr.bf16.mxu0 0
    %740 = vmatmul.mubr.bf16.gmra.mrb[0].mxu0 %v594
    %v741 = vpop.f32.mrb[0].mxu0
    %v742 = vadd.f32 %v549, %v741
    %v743 = vpop.f32.mrb[0].mxu0
    %v744 = vpop.f32.mrb[0].mxu0
    %v745 = vadd.f32 %v552, %v744
    %v746 = vpop.f32.mrb[0].mxu0
    %747 = vdwg.mxu0
    %v748 = vld [vmem:[%s6] sm:$0x1]
    %v750 = vlaneseq
    %v751 = vshrl.u32 %v750, 7
    %v752 = vsub.s32 0, %v751
    %v753 = vrot.slane %v748, %v752
    %v755 = vadd.f32 %v686, %v753
    %v756 = vadd.f32 %v689, %v753
    %v757 = vadd.f32 %v694, %v753
    %v758 = vadd.f32 %v697, %v753
    %v759 = vadd.f32 %v702, %v753
    %v760 = vadd.f32 %v705, %v753
    %v761 = vadd.f32 %v710, %v753
    %v762 = vadd.f32 %v713, %v753
    %v763 = vadd.f32 %v718, %v753
    %v764 = vadd.f32 %v721, %v753
    %v765 = vadd.f32 %v726, %v753
    %v766 = vadd.f32 %v729, %v753
    %v767 = vadd.f32 %v734, %v753
    %v768 = vadd.f32 %v737, %v753
    %v769 = vadd.f32 %v742, %v753
    %v770 = vadd.f32 %v745, %v753
    %v771 = vmax.f32 %v755, 0.0
    %v772 = vmax.f32 %v756, 0.0
    %v773 = vmax.f32 %v757, 0.0
    %v774 = vmax.f32 %v758, 0.0
    %v775 = vmax.f32 %v759, 0.0
    %v776 = vmax.f32 %v760, 0.0
    %v777 = vmax.f32 %v761, 0.0
    %v778 = vmax.f32 %v762, 0.0
    %v779 = vmax.f32 %v763, 0.0
    %v780 = vmax.f32 %v764, 0.0
    %v781 = vmax.f32 %v765, 0.0
    %v782 = vmax.f32 %v766, 0.0
    %v783 = vmax.f32 %v767, 0.0
    %v784 = vmax.f32 %v768, 0.0
    %v785 = vmax.f32 %v769, 0.0
    %v786 = vmax.f32 %v770, 0.0
    %v787 = vpack.c.bf16 %v772, %v771
    %v788 = vpack.c.bf16 %v774, %v773
    %v789 = vpack.c.bf16 %v776, %v775
    %v790 = vpack.c.bf16 %v778, %v777
    %v791 = vpack.c.bf16 %v780, %v779
    %v792 = vpack.c.bf16 %v782, %v781
    %v793 = vpack.c.bf16 %v784, %v783
    %v794 = vpack.c.bf16 %v786, %v785
    %v803 = vunpack.c.l.b16 %v787
    %v804 = vunpack.c.h.b16 %v787
    %v805 = vunpack.c.l.b16 %v788
    %v806 = vunpack.c.h.b16 %v788
    %v807 = vunpack.c.l.b16 %v789
    %v808 = vunpack.c.h.b16 %v789
    %v809 = vunpack.c.l.b16 %v790
    %v810 = vunpack.c.h.b16 %v790
    %v811 = vunpack.c.l.b16 %v791
    %v812 = vunpack.c.h.b16 %v791
    %v813 = vunpack.c.l.b16 %v792
    %v814 = vunpack.c.h.b16 %v792
    %v815 = vunpack.c.l.b16 %v793
    %v816 = vunpack.c.h.b16 %v793
    %v817 = vunpack.c.l.b16 %v794
    %v818 = vunpack.c.h.b16 %v794
    %v819 = vpack.c.b16 %v803, %v803
    %v820 = vpack.c.b16 %v804, %v804
    %v821 = vpack.c.b16 %v805, %v805
    %v822 = vpack.c.b16 %v806, %v806
    %v823 = vpack.c.b16 %v807, %v807
    %v824 = vpack.c.b16 %v808, %v808
    %v825 = vpack.c.b16 %v809, %v809
    %v826 = vpack.c.b16 %v810, %v810
    %v827 = vpack.c.b16 %v811, %v811
    %v828 = vpack.c.b16 %v812, %v812
    %v829 = vpack.c.b16 %v813, %v813
    %v830 = vpack.c.b16 %v814, %v814
    %v831 = vpack.c.b16 %v815, %v815
    %v832 = vpack.c.b16 %v816, %v816
    %v833 = vpack.c.b16 %v817, %v817
    %v834 = vpack.c.b16 %v818, %v818
    %851 = vst [vmem:[#allocation8] sm:$0xf] %v819
    %852 = vst [vmem:[#allocation8 + $0x4] sm:$0xf] %v820
    %853 = vst [vmem:[#allocation8 + $0x8] sm:$0xf] %v821
    %854 = vst [vmem:[#allocation8 + $0xc] sm:$0xf] %v822
    %855 = vst [vmem:[#allocation8 + $0x10] sm:$0xf] %v823
    %856 = vst [vmem:[#allocation8 + $0x14] sm:$0xf] %v824
    %857 = vst [vmem:[#allocation8 + $0x18] sm:$0xf] %v825
    %858 = vst [vmem:[#allocation8 + $0x1c] sm:$0xf] %v826
    %859 = vst [vmem:[#allocation8 + $0x20] sm:$0xf] %v827
    %860 = vst [vmem:[#allocation8 + $0x24] sm:$0xf] %v828
    %861 = vst [vmem:[#allocation8 + $0x28] sm:$0xf] %v829
    %862 = vst [vmem:[#allocation8 + $0x2c] sm:$0xf] %v830
    %863 = vst [vmem:[#allocation8 + $0x30] sm:$0xf] %v831
    %864 = vst [vmem:[#allocation8 + $0x34] sm:$0xf] %v832
    %865 = vst [vmem:[#allocation8 + $0x38] sm:$0xf] %v833
    %866 = vst [vmem:[#allocation8 + $0x3c] sm:$0xf] %v834
    // Predicated region
    $region42: #{tpu_custom_call.1} parent=1 // pred_check
      _
    $region43: #{tpu_custom_call.1} parent=1 // pred_check_branch
      %868 = sbr.rel (0) target = $region45
    $region44: #{tpu_custom_call.1} parent=1 // pred_region
      %s870 = ssub.s32 1024, 1024
      %871 = vsyncadd [#allocation4], %s870
      %s872 = sshll.u32 [#allocation8], 4
      %s873 = int_to_ptr.vmem [resolvable:$true] %s872
      %878 = dma.vmem_to_hbm [thread:$0]  %s873, 1024, %s7, [#allocation4], 64, 64, 4
    $region45: #{tpu_custom_call.1} parent=1 // pred_fallthru
      _
    // Predicated region
    $region46: #{tpu_custom_call.1} parent=1 // pred_check
      _
    $region47: #{tpu_custom_call.1} parent=1 // pred_check_branch
      %880 = sbr.rel (0) target = $region49
    $region48: #{tpu_custom_call.1} parent=1 // pred_region
      %881 = dma.done [#allocation4], 1024
    $region49: #{tpu_custom_call.1} parent=1 // pred_fallthru
      _
    %882 = vsyncpa [#allocation3], 1
    %883 = vsyncpa [#allocation6], 1
    %884 = vsyncpa [#allocation4], 1

</llo_original>
